<compile_context>
chip_gen: v6e
topology: v6e:2x2x1
jax: 0.10.0
libtpu: 0.0.40
codegen_flags: <defaults>
</compile_context>

<pallas_src>
import functools

import jax
import jax.numpy as jnp
from jax.experimental import pallas as pl
from jax.experimental.pallas import tpu as pltpu


def _vae_encode_kernel(x_ref,
                       w1_ref, b1_ref,
                       w2_ref, b2_ref,
                       w3_ref, b3_ref,
                       wh_ref, bh_ref,
                       eps_ref,
                       out_ref, *, latent):
    """One batch tile: encode_nn (3x Linear+ReLU) -> fused [mu|log_var] head
    -> reparameterize.  Writes [mu | log_var | z] into a single packed
    (TB, 3*latent) output block."""
    f32 = jnp.float32
    x = x_ref[...]

    # encode_nn: Linear -> ReLU -> Linear -> ReLU -> Linear -> ReLU  (MXU + VPU)
    h = jnp.dot(x, w1_ref[...], preferred_element_type=f32) + b1_ref[...].astype(f32)
    h = jnp.maximum(h, 0.0)
    h = jnp.dot(h.astype(w2_ref.dtype), w2_ref[...],
                preferred_element_type=f32) + b2_ref[...].astype(f32)
    h = jnp.maximum(h, 0.0)
    h = jnp.dot(h.astype(w3_ref.dtype), w3_ref[...],
                preferred_element_type=f32) + b3_ref[...].astype(f32)
    h = jnp.maximum(h, 0.0)

    # fused heads: one matmul producing [mu | log_var]  (single MXU push)
    head = jnp.dot(h.astype(wh_ref.dtype), wh_ref[...],
                   preferred_element_type=f32) + bh_ref[...].astype(f32)
    mu = head[:, :latent]
    log_var = head[:, latent:]

    # reparameterize: z = eps * exp(0.5 * log_var) + mu   (EUP exp + VPU fma, f32)
    std = jnp.exp(0.5 * log_var)
    z = eps_ref[...].astype(f32) * std + mu

    # packed output slab: [mu | log_var | z]  -> one output DMA per block
    out_ref[:, 0:2 * latent] = head.astype(out_ref.dtype)
    out_ref[:, 2 * latent:3 * latent] = z.astype(out_ref.dtype)


def vae_encode(x, params, eps, *, block_b=None, compute_dtype=jnp.float32):
    """params: dict with w1,b1,w2,b2,w3,b3,wmu,bmu,wlv,blv (2-D arrays).

    compute_dtype: dtype used for MXU operands (use jnp.bfloat16 on v6e/v7x);
    accumulation, bias-add, exp and the reparameterization stay in f32.
    """
    B, d_in = x.shape
    latent = params["bmu"].shape[-1]

    # Fuse the two heads into one weight / one bias.
    w_head = jnp.concatenate([params["wmu"], params["wlv"]], axis=1)
    b_head = jnp.concatenate([params["bmu"], params["blv"]], axis=1)

    cd = compute_dtype
    w1 = params["w1"].astype(cd)
    w2 = params["w2"].astype(cd)
    w3 = params["w3"].astype(cd)
    wh = w_head.astype(cd)
    b1, b2, b3, bh = params["b1"], params["b2"], params["b3"], b_head
    x_c = x.astype(cd)

    # Batch tiling: weights stay VMEM-resident, activation tiles are pipelined.
    if block_b is None:
        block_b = B if B <= 256 else 256
    if B % block_b != 0 or (block_b % 8 != 0 and block_b != B):
        block_b = B
    grid = (B // block_b,)

    def batch_map(i):
        return (i, 0)

    def const_map(i):
        return (0, 0)

    def full_spec(a):
        return pl.BlockSpec(a.shape, const_map)

    in_specs = [
        pl.BlockSpec((block_b, d_in), batch_map),       # x
        full_spec(w1), full_spec(b1),
        full_spec(w2), full_spec(b2),
        full_spec(w3), full_spec(b3),
        full_spec(wh), full_spec(bh),
        pl.BlockSpec((block_b, latent), batch_map),     # eps
    ]
    out_specs = pl.BlockSpec((block_b, 3 * latent), batch_map)
    out_shape = jax.ShapeDtypeStruct((B, 3 * latent), jnp.float32)

    kernel = functools.partial(_vae_encode_kernel, latent=latent)

    packed = pl.pallas_call(
        kernel,
        out_shape=out_shape,
        grid=grid,
        in_specs=in_specs,
        out_specs=out_specs,
        compiler_params=pltpu.CompilerParams(
            dimension_semantics=("parallel",)),
    )(x_c, w1, b1, w2, b2, w3, b3, wh, bh, eps)

    mu = packed[:, :latent]
    log_var = packed[:, latent:2 * latent]
    z = packed[:, 2 * latent:]
    return z, mu, log_var


def _init_params(key, d_in, l1, l2, l3, latent):
    """Deterministic synthetic parameter init (uniform, PyTorch-like scale)."""
    ks = jax.random.split(key, 10)

    def lin(kw, kb, fan_in, fan_out):
        bound = 1.0 / jnp.sqrt(fan_in)
        w = jax.random.uniform(kw, (fan_in, fan_out), jnp.float32, -bound, bound)
        b = jax.random.uniform(kb, (1, fan_out), jnp.float32, -bound, bound)
        return w, b

    w1, b1 = lin(ks[0], ks[1], d_in, l1)
    w2, b2 = lin(ks[2], ks[3], l1, l2)
    w3, b3 = lin(ks[4], ks[5], l2, l3)
    wmu, bmu = lin(ks[6], ks[7], l3, latent)
    wlv, blv = lin(ks[8], ks[9], l3, latent)
    return dict(w1=w1, b1=b1, w2=w2, b2=b2, w3=w3, b3=b3,
                wmu=wmu, bmu=bmu, wlv=wlv, blv=blv)


def _reference(x, p, eps):
    h = jnp.maximum(x @ p["w1"] + p["b1"], 0.0)
    h = jnp.maximum(h @ p["w2"] + p["b2"], 0.0)
    h = jnp.maximum(h @ p["w3"] + p["b3"], 0.0)
    mu = h @ p["wmu"] + p["bmu"]
    lv = h @ p["wlv"] + p["blv"]
    z = eps * jnp.exp(0.5 * lv) + mu
    return z, mu, lv


if __name__ == "__main__":
    # Small shapes consistent with the module:
    # len_max_molec1Hot = 32, layer_1d = 64, layer_2d = 48, layer_3d = 32, latent = 16
    B, D_IN, L1, L2, L3, LATENT = 16, 32, 64, 48, 32, 16

    key = jax.random.PRNGKey(0)
    k_x, k_eps, k_p = jax.random.split(key, 3)

    x = jax.random.normal(k_x, (B, D_IN), jnp.float32)
    eps = jax.random.normal(k_eps, (B, LATENT), jnp.float32)  # randn_like(std)
    params = _init_params(k_p, D_IN, L1, L2, L3, LATENT)

    # Use block_b=8 so the batch grid (and its pipelining path) is exercised.
    z, mu, log_var = jax.block_until_ready(
        vae_encode(x, params, eps, block_b=8))

    z_r, mu_r, lv_r = _reference(x, params, eps)
    assert jnp.allclose(z, z_r, atol=1e-5, rtol=1e-5)
    assert jnp.allclose(mu, mu_r, atol=1e-5, rtol=1e-5)
    assert jnp.allclose(log_var, lv_r, atol=1e-5, rtol=1e-5)

    print("KERNEL_OK")
</pallas_src>

<mosaic_0001>
module attributes {stable_mosaic.version = 11 : i64} {
  func.func @_vae_encode_kernel(%arg0: i32, %arg1: memref<8x32xf32, #tpu.memory_space<vmem>>, %arg2: memref<32x64xf32, #tpu.memory_space<vmem>>, %arg3: memref<1x64xf32, #tpu.memory_space<vmem>>, %arg4: memref<64x48xf32, #tpu.memory_space<vmem>>, %arg5: memref<1x48xf32, #tpu.memory_space<vmem>>, %arg6: memref<48x32xf32, #tpu.memory_space<vmem>>, %arg7: memref<1x32xf32, #tpu.memory_space<vmem>>, %arg8: memref<32x32xf32, #tpu.memory_space<vmem>>, %arg9: memref<1x32xf32, #tpu.memory_space<vmem>>, %arg10: memref<8x16xf32, #tpu.memory_space<vmem>>, %arg11: memref<8x48xf32, #tpu.memory_space<vmem>>) attributes {dimension_semantics = [#tpu.dimension_semantics<parallel>], iteration_bounds = array<i64: 2>, scalar_prefetch = 0 : i64, scratch_operands = 0 : i64, tpu.core_type = #tpu.core_type<tc>, window_params = [{transform_indices = @transform_0, window_bounds = array<i64: 8, 32>}, {pipeline_mode = #tpu.pipeline_mode<synchronous>, transform_indices = @transform_1, window_bounds = array<i64: 32, 64>}, {pipeline_mode = #tpu.pipeline_mode<synchronous>, transform_indices = @transform_2, window_bounds = array<i64: 1, 64>}, {pipeline_mode = #tpu.pipeline_mode<synchronous>, transform_indices = @transform_3, window_bounds = array<i64: 64, 48>}, {pipeline_mode = #tpu.pipeline_mode<synchronous>, transform_indices = @transform_4, window_bounds = array<i64: 1, 48>}, {pipeline_mode = #tpu.pipeline_mode<synchronous>, transform_indices = @transform_5, window_bounds = array<i64: 48, 32>}, {pipeline_mode = #tpu.pipeline_mode<synchronous>, transform_indices = @transform_6, window_bounds = array<i64: 1, 32>}, {pipeline_mode = #tpu.pipeline_mode<synchronous>, transform_indices = @transform_7, window_bounds = array<i64: 32, 32>}, {pipeline_mode = #tpu.pipeline_mode<synchronous>, transform_indices = @transform_8, window_bounds = array<i64: 1, 32>}, {transform_indices = @transform_9, window_bounds = array<i64: 8, 16>}, {transform_indices = @transform_10, window_bounds = array<i64: 8, 48>}]} {
    %c0 = arith.constant 0 : index
    %c0_0 = arith.constant 0 : index
    %0 = vector.load %arg1[%c0, %c0_0] : memref<8x32xf32, #tpu.memory_space<vmem>>, vector<8x32xf32>
    %c0_1 = arith.constant 0 : index
    %c0_2 = arith.constant 0 : index
    %1 = vector.load %arg2[%c0_1, %c0_2] : memref<32x64xf32, #tpu.memory_space<vmem>>, vector<32x64xf32>
    %cst = arith.constant dense<0.000000e+00> : vector<8x64xf32>
    %2 = tpu.matmul %0, %1, %cst {dimension_numbers = #tpu.dot_dimension_numbers<[1], [0], [0], [1], [0, 0, 1, 1], [], []>} : vector<8x32xf32>, vector<32x64xf32>, vector<8x64xf32> -> vector<8x64xf32>
    %c0_3 = arith.constant 0 : index
    %c0_4 = arith.constant 0 : index
    %3 = vector.load %arg3[%c0_3, %c0_4] : memref<1x64xf32, #tpu.memory_space<vmem>>, vector<1x64xf32>
    %4 = vector.broadcast %3 : vector<1x64xf32> to vector<8x64xf32>
    %5 = arith.addf %2, %4 : vector<8x64xf32>
    %cst_5 = arith.constant 0.000000e+00 : f32
    %6 = vector.broadcast %cst_5 : f32 to vector<8x64xf32>
    %7 = arith.maximumf %5, %6 : vector<8x64xf32>
    %c0_6 = arith.constant 0 : index
    %c0_7 = arith.constant 0 : index
    %8 = vector.load %arg4[%c0_6, %c0_7] : memref<64x48xf32, #tpu.memory_space<vmem>>, vector<64x48xf32>
    %cst_8 = arith.constant dense<0.000000e+00> : vector<8x48xf32>
    %9 = tpu.matmul %7, %8, %cst_8 {dimension_numbers = #tpu.dot_dimension_numbers<[1], [0], [0], [1], [0, 0, 1, 1], [], []>} : vector<8x64xf32>, vector<64x48xf32>, vector<8x48xf32> -> vector<8x48xf32>
    %c0_9 = arith.constant 0 : index
    %c0_10 = arith.constant 0 : index
    %10 = vector.load %arg5[%c0_9, %c0_10] : memref<1x48xf32, #tpu.memory_space<vmem>>, vector<1x48xf32>
    %11 = vector.broadcast %10 : vector<1x48xf32> to vector<8x48xf32>
    %12 = arith.addf %9, %11 : vector<8x48xf32>
    %cst_11 = arith.constant 0.000000e+00 : f32
    %13 = vector.broadcast %cst_11 : f32 to vector<8x48xf32>
    %14 = arith.maximumf %12, %13 : vector<8x48xf32>
    %c0_12 = arith.constant 0 : index
    %c0_13 = arith.constant 0 : index
    %15 = vector.load %arg6[%c0_12, %c0_13] : memref<48x32xf32, #tpu.memory_space<vmem>>, vector<48x32xf32>
    %cst_14 = arith.constant dense<0.000000e+00> : vector<8x32xf32>
    %16 = tpu.matmul %14, %15, %cst_14 {dimension_numbers = #tpu.dot_dimension_numbers<[1], [0], [0], [1], [0, 0, 1, 1], [], []>} : vector<8x48xf32>, vector<48x32xf32>, vector<8x32xf32> -> vector<8x32xf32>
    %c0_15 = arith.constant 0 : index
    %c0_16 = arith.constant 0 : index
    %17 = vector.load %arg7[%c0_15, %c0_16] : memref<1x32xf32, #tpu.memory_space<vmem>>, vector<1x32xf32>
    %18 = vector.broadcast %17 : vector<1x32xf32> to vector<8x32xf32>
    %19 = arith.addf %16, %18 : vector<8x32xf32>
    %cst_17 = arith.constant 0.000000e+00 : f32
    %20 = vector.broadcast %cst_17 : f32 to vector<8x32xf32>
    %21 = arith.maximumf %19, %20 : vector<8x32xf32>
    %c0_18 = arith.constant 0 : index
    %c0_19 = arith.constant 0 : index
    %22 = vector.load %arg8[%c0_18, %c0_19] : memref<32x32xf32, #tpu.memory_space<vmem>>, vector<32x32xf32>
    %cst_20 = arith.constant dense<0.000000e+00> : vector<8x32xf32>
    %23 = tpu.matmul %21, %22, %cst_20 {dimension_numbers = #tpu.dot_dimension_numbers<[1], [0], [0], [1], [0, 0, 1, 1], [], []>} : vector<8x32xf32>, vector<32x32xf32>, vector<8x32xf32> -> vector<8x32xf32>
    %c0_21 = arith.constant 0 : index
    %c0_22 = arith.constant 0 : index
    %24 = vector.load %arg9[%c0_21, %c0_22] : memref<1x32xf32, #tpu.memory_space<vmem>>, vector<1x32xf32>
    %25 = vector.broadcast %24 : vector<1x32xf32> to vector<8x32xf32>
    %26 = arith.addf %23, %25 : vector<8x32xf32>
    %27 = vector.extract_strided_slice %26 {offsets = [0, 0], sizes = [8, 16], strides = [1, 1]} : vector<8x32xf32> to vector<8x16xf32>
    %28 = vector.extract_strided_slice %26 {offsets = [0, 16], sizes = [8, 16], strides = [1, 1]} : vector<8x32xf32> to vector<8x16xf32>
    %cst_23 = arith.constant 5.000000e-01 : f32
    %29 = vector.broadcast %cst_23 : f32 to vector<8x16xf32>
    %30 = arith.mulf %29, %28 : vector<8x16xf32>
    %31 = math.exp %30 : vector<8x16xf32>
    %c0_24 = arith.constant 0 : index
    %c0_25 = arith.constant 0 : index
    %32 = vector.load %arg10[%c0_24, %c0_25] : memref<8x16xf32, #tpu.memory_space<vmem>>, vector<8x16xf32>
    %33 = arith.mulf %32, %31 : vector<8x16xf32>
    %34 = arith.addf %33, %27 : vector<8x16xf32>
    %c0_26 = arith.constant 0 : index
    %c0_27 = arith.constant 0 : index
    %35 = vector.load %arg11[%c0_26, %c0_27] : memref<8x48xf32, #tpu.memory_space<vmem>>, vector<8x32xf32>
    tpu.vector_store %arg11[%c0_26, %c0_27], %26 {strides = array<i32>} : memref<8x48xf32, #tpu.memory_space<vmem>>, vector<8x32xf32>,
    %c0_28 = arith.constant 0 : index
    %c32 = arith.constant 32 : index
    %36 = vector.load %arg11[%c0_28, %c32] : memref<8x48xf32, #tpu.memory_space<vmem>>, vector<8x16xf32>
    tpu.vector_store %arg11[%c0_28, %c32], %34 {strides = array<i32>} : memref<8x48xf32, #tpu.memory_space<vmem>>, vector<8x16xf32>,
    return
  }
  func.func @transform_0(%arg0: i32) -> (i32, i32) {
    %c0_i32 = arith.constant 0 : i32
    %c0_i32_0 = arith.constant 0 : i32
    return %arg0, %c0_i32 : i32, i32
  }
  func.func @transform_1(%arg0: i32) -> (i32, i32) {
    %c0_i32 = arith.constant 0 : i32
    %c0_i32_0 = arith.constant 0 : i32
    %c0_i32_1 = arith.constant 0 : i32
    return %c0_i32, %c0_i32_0 : i32, i32
  }
  func.func @transform_2(%arg0: i32) -> (i32, i32) {
    %c0_i32 = arith.constant 0 : i32
    %c0_i32_0 = arith.constant 0 : i32
    %c0_i32_1 = arith.constant 0 : i32
    return %c0_i32, %c0_i32_0 : i32, i32
  }
  func.func @transform_3(%arg0: i32) -> (i32, i32) {
    %c0_i32 = arith.constant 0 : i32
    %c0_i32_0 = arith.constant 0 : i32
    %c0_i32_1 = arith.constant 0 : i32
    return %c0_i32, %c0_i32_0 : i32, i32
  }
  func.func @transform_4(%arg0: i32) -> (i32, i32) {
    %c0_i32 = arith.constant 0 : i32
    %c0_i32_0 = arith.constant 0 : i32
    %c0_i32_1 = arith.constant 0 : i32
    return %c0_i32, %c0_i32_0 : i32, i32
  }
  func.func @transform_5(%arg0: i32) -> (i32, i32) {
    %c0_i32 = arith.constant 0 : i32
    %c0_i32_0 = arith.constant 0 : i32
    %c0_i32_1 = arith.constant 0 : i32
    return %c0_i32, %c0_i32_0 : i32, i32
  }
  func.func @transform_6(%arg0: i32) -> (i32, i32) {
    %c0_i32 = arith.constant 0 : i32
    %c0_i32_0 = arith.constant 0 : i32
    %c0_i32_1 = arith.constant 0 : i32
    return %c0_i32, %c0_i32_0 : i32, i32
  }
  func.func @transform_7(%arg0: i32) -> (i32, i32) {
    %c0_i32 = arith.constant 0 : i32
    %c0_i32_0 = arith.constant 0 : i32
    %c0_i32_1 = arith.constant 0 : i32
    return %c0_i32, %c0_i32_0 : i32, i32
  }
  func.func @transform_8(%arg0: i32) -> (i32, i32) {
    %c0_i32 = arith.constant 0 : i32
    %c0_i32_0 = arith.constant 0 : i32
    %c0_i32_1 = arith.constant 0 : i32
    return %c0_i32, %c0_i32_0 : i32, i32
  }
  func.func @transform_9(%arg0: i32) -> (i32, i32) {
    %c0_i32 = arith.constant 0 : i32
    %c0_i32_0 = arith.constant 0 : i32
    return %arg0, %c0_i32 : i32, i32
  }
  func.func @transform_10(%arg0: i32) -> (i32, i32) {
    %c0_i32 = arith.constant 0 : i32
    %c0_i32_0 = arith.constant 0 : i32
    return %arg0, %c0_i32 : i32, i32
  }
}

</mosaic_0001>

<llo_original>
// kernel: tpu_custom_call.1
$region0: #{tpu_custom_call.1}
  #allocation0 [shape = 'u32[]', space=smem, size = 0x4, offset = 0x4, fixed_abs, tag = 'smem constant byte address 0x4 - core index']
  #allocation1 [shape = 'u32[144,128]{1,0:T(1,128)}', space=vmem, size = 0x12000, scoped, tag = 'internal scratch']
  %s0 = inlined_call_operand.vmem [shape: f32[16,32], index: 0, kind: input, shape index: {}]
  %s1 = inlined_call_operand.vmem [shape: f32[32,64], index: 1, kind: input, shape index: {}]
  %s2 = inlined_call_operand.vmem [shape: f32[1,64], index: 2, kind: input, shape index: {}]
  %s3 = inlined_call_operand.vmem [shape: f32[64,48], index: 3, kind: input, shape index: {}]
  %s4 = inlined_call_operand.vmem [shape: f32[1,48], index: 4, kind: input, shape index: {}]
  %s5 = inlined_call_operand.vmem [shape: f32[48,32], index: 5, kind: input, shape index: {}]
  %s6 = inlined_call_operand.vmem [shape: f32[1,32], index: 6, kind: input, shape index: {}]
  %s7 = inlined_call_operand.vmem [shape: f32[32,32], index: 7, kind: input, shape index: {}]
  %s8 = inlined_call_operand.vmem [shape: f32[1,32], index: 8, kind: input, shape index: {}]
  %s9 = inlined_call_operand.vmem [shape: f32[16,16], index: 9, kind: input, shape index: {}]
  %s10 = inlined_call_operand.hbm [shape: f32[16,48], index: 10, kind: output, shape index: {}]
  %s11 = sld [smem:[#allocation0]]
  $region73: #{tpu_custom_call.1} parent=0
    _
  %s13 = ssub.s32 1, %s11
  %s14 = scalar_select 0, %s13, %s11
  $region1: #{tpu_custom_call.1} parent=0
    #allocation2 [shape = 'u8[8192]{0}', space=vmem, size = 0x2000, scoped, tag = 'output window, operand 0']
    #allocation3 [shape = 's32[2]{0}', space=sflag, size = 0x8, scoped, tag = 'scoped memory for tpu_custom_call.1']
    %15 = vsyncpa [#allocation3], 0
    %s16 = scalar_lea.sflag [#allocation3], 1
    %17 = vsyncpa %s16, 0
    loop: start=0, step=1, limit=4
    $region2: #{tpu_custom_call.1} parent=1 // loop_pre_header
      _
    $region3: #{tpu_custom_call.1} parent=1 // loop_header
      %s19 = sphi 0, %s23
      %p20 = scmp.ge.s32.totalorder %s19, 4
      %s29 = sphi 0, %s31
      %s32 = sphi 0, %s29
      %s33 = sphi 0, %s32
      %s49 = sphi 0, %s33
      %s53 = sphi 0, %s53
      %s55 = sphi 0, %s53
      %s56 = sphi 0, %s55
      %s70 = sphi 0, %s56
      %s74 = sphi 0, %s74
      %s76 = sphi 0, %s74
      %s77 = sphi 0, %s76
      %s91 = sphi 0, %s77
      %s95 = sphi 0, %s95
      %s97 = sphi 0, %s95
      %s98 = sphi 0, %s97
      %s112 = sphi 0, %s98
      %s116 = sphi 0, %s116
      %s118 = sphi 0, %s116
      %s119 = sphi 0, %s118
      %s133 = sphi 0, %s119
      %s137 = sphi 0, %s137
      %s139 = sphi 0, %s137
      %s140 = sphi 0, %s139
      %s154 = sphi 0, %s140
      %s158 = sphi 0, %s158
      %s160 = sphi 0, %s158
      %s161 = sphi 0, %s160
      %s175 = sphi 0, %s161
      %s179 = sphi 0, %s179
      %s181 = sphi 0, %s179
      %s182 = sphi 0, %s181
      %s196 = sphi 0, %s182
      %s200 = sphi 0, %s200
      %s202 = sphi 0, %s200
      %s203 = sphi 0, %s202
      %s217 = sphi 0, %s203
      %s223 = sphi 0, %s225
      %s226 = sphi 0, %s223
      %s227 = sphi 0, %s226
      %s243 = sphi 0, %s227
      %s249 = sphi 0, %s251
      %s252 = sphi 0, %s249
      %s253 = sphi 0, %s252
      %s269 = sphi 0, %s253
    $region4: #{tpu_custom_call.1} parent=1 // loop_header_branch
      %22 = sbr.rel (%p20) target = $region8
    $region5: #{tpu_custom_call.1} parent=1 // loop_body
      %s24 = ssub.s32 %s19, 1
      %s25 = ssub.s32 %s19, 2
      %s26 = sadd.s32 %s19, 1
      %s27 = ssub.s32 %s19, %s26
      %p28 = scmp.eq.s32.totalorder %s27, 0
      %s30 = sadd.s32 %s29, 1
      %s31 = scalar_select %p28, %s29, %s30
      %p34 = pneg %p28
      %p35 = scmp.eq.s32.totalorder %s19, 1
      %p36 = por %p34, %p35
      %p37 = scmp.ne.s32.totalorder %s29, %s32
      %p38 = scmp.eq.s32.totalorder %s19, 0
      %p39 = por %p37, %p38
      %p40 = scmp.ne.s32.totalorder %s29, %s32
      %p41 = scmp.eq.s32.totalorder %s24, 1
      %p42 = por %p40, %p41
      %p43 = scmp.ne.s32.totalorder %s32, %s33
      %p44 = scmp.eq.s32.totalorder %s24, 0
      %p45 = por %p43, %p44
      %p46 = scmp.ne.s32.totalorder %s32, %s33
      %p47 = scmp.eq.s32.totalorder %s25, 1
      %p48 = por %p46, %p47
      %p50 = scmp.ne.s32.totalorder %s33, %s49
      %p51 = scmp.eq.s32.totalorder %s25, 0
      %p52 = por %p50, %p51
      %s54 = sadd.s32 %s53, 1
      %p57 = scmp.eq.s32.totalorder %s19, 1
      %p58 = scmp.ne.s32.totalorder %s53, %s55
      %p59 = scmp.eq.s32.totalorder %s19, 0
      %p60 = por %p58, %p59
      %p61 = scmp.ne.s32.totalorder %s53, %s55
      %p62 = scmp.eq.s32.totalorder %s24, 1
      %p63 = por %p61, %p62
      %p64 = scmp.ne.s32.totalorder %s55, %s56
      %p65 = scmp.eq.s32.totalorder %s24, 0
      %p66 = por %p64, %p65
      %p67 = scmp.ne.s32.totalorder %s55, %s56
      %p68 = scmp.eq.s32.totalorder %s25, 1
      %p69 = por %p67, %p68
      %p71 = scmp.ne.s32.totalorder %s56, %s70
      %p72 = scmp.eq.s32.totalorder %s25, 0
      %p73 = por %p71, %p72
      %s75 = sadd.s32 %s74, 1
      %p78 = scmp.eq.s32.totalorder %s19, 1
      %p79 = scmp.ne.s32.totalorder %s74, %s76
      %p80 = scmp.eq.s32.totalorder %s19, 0
      %p81 = por %p79, %p80
      %p82 = scmp.ne.s32.totalorder %s74, %s76
      %p83 = scmp.eq.s32.totalorder %s24, 1
      %p84 = por %p82, %p83
      %p85 = scmp.ne.s32.totalorder %s76, %s77
      %p86 = scmp.eq.s32.totalorder %s24, 0
      %p87 = por %p85, %p86
      %p88 = scmp.ne.s32.totalorder %s76, %s77
      %p89 = scmp.eq.s32.totalorder %s25, 1
      %p90 = por %p88, %p89
      %p92 = scmp.ne.s32.totalorder %s77, %s91
      %p93 = scmp.eq.s32.totalorder %s25, 0
      %p94 = por %p92, %p93
      %s96 = sadd.s32 %s95, 1
      %p99 = scmp.eq.s32.totalorder %s19, 1
      %p100 = scmp.ne.s32.totalorder %s95, %s97
      %p101 = scmp.eq.s32.totalorder %s19, 0
      %p102 = por %p100, %p101
      %p103 = scmp.ne.s32.totalorder %s95, %s97
      %p104 = scmp.eq.s32.totalorder %s24, 1
      %p105 = por %p103, %p104
      %p106 = scmp.ne.s32.totalorder %s97, %s98
      %p107 = scmp.eq.s32.totalorder %s24, 0
      %p108 = por %p106, %p107
      %p109 = scmp.ne.s32.totalorder %s97, %s98
      %p110 = scmp.eq.s32.totalorder %s25, 1
      %p111 = por %p109, %p110
      %p113 = scmp.ne.s32.totalorder %s98, %s112
      %p114 = scmp.eq.s32.totalorder %s25, 0
      %p115 = por %p113, %p114
      %s117 = sadd.s32 %s116, 1
      %p120 = scmp.eq.s32.totalorder %s19, 1
      %p121 = scmp.ne.s32.totalorder %s116, %s118
      %p122 = scmp.eq.s32.totalorder %s19, 0
      %p123 = por %p121, %p122
      %p124 = scmp.ne.s32.totalorder %s116, %s118
      %p125 = scmp.eq.s32.totalorder %s24, 1
      %p126 = por %p124, %p125
      %p127 = scmp.ne.s32.totalorder %s118, %s119
      %p128 = scmp.eq.s32.totalorder %s24, 0
      %p129 = por %p127, %p128
      %p130 = scmp.ne.s32.totalorder %s118, %s119
      %p131 = scmp.eq.s32.totalorder %s25, 1
      %p132 = por %p130, %p131
      %p134 = scmp.ne.s32.totalorder %s119, %s133
      %p135 = scmp.eq.s32.totalorder %s25, 0
      %p136 = por %p134, %p135
      %s138 = sadd.s32 %s137, 1
      %p141 = scmp.eq.s32.totalorder %s19, 1
      %p142 = scmp.ne.s32.totalorder %s137, %s139
      %p143 = scmp.eq.s32.totalorder %s19, 0
      %p144 = por %p142, %p143
      %p145 = scmp.ne.s32.totalorder %s137, %s139
      %p146 = scmp.eq.s32.totalorder %s24, 1
      %p147 = por %p145, %p146
      %p148 = scmp.ne.s32.totalorder %s139, %s140
      %p149 = scmp.eq.s32.totalorder %s24, 0
      %p150 = por %p148, %p149
      %p151 = scmp.ne.s32.totalorder %s139, %s140
      %p152 = scmp.eq.s32.totalorder %s25, 1
      %p153 = por %p151, %p152
      %p155 = scmp.ne.s32.totalorder %s140, %s154
      %p156 = scmp.eq.s32.totalorder %s25, 0
      %p157 = por %p155, %p156
      %s159 = sadd.s32 %s158, 1
      %p162 = scmp.eq.s32.totalorder %s19, 1
      %p163 = scmp.ne.s32.totalorder %s158, %s160
      %p164 = scmp.eq.s32.totalorder %s19, 0
      %p165 = por %p163, %p164
      %p166 = scmp.ne.s32.totalorder %s158, %s160
      %p167 = scmp.eq.s32.totalorder %s24, 1
      %p168 = por %p166, %p167
      %p169 = scmp.ne.s32.totalorder %s160, %s161
      %p170 = scmp.eq.s32.totalorder %s24, 0
      %p171 = por %p169, %p170
      %p172 = scmp.ne.s32.totalorder %s160, %s161
      %p173 = scmp.eq.s32.totalorder %s25, 1
      %p174 = por %p172, %p173
      %p176 = scmp.ne.s32.totalorder %s161, %s175
      %p177 = scmp.eq.s32.totalorder %s25, 0
      %p178 = por %p176, %p177
      %s180 = sadd.s32 %s179, 1
      %p183 = scmp.eq.s32.totalorder %s19, 1
      %p184 = scmp.ne.s32.totalorder %s179, %s181
      %p185 = scmp.eq.s32.totalorder %s19, 0
      %p186 = por %p184, %p185
      %p187 = scmp.ne.s32.totalorder %s179, %s181
      %p188 = scmp.eq.s32.totalorder %s24, 1
      %p189 = por %p187, %p188
      %p190 = scmp.ne.s32.totalorder %s181, %s182
      %p191 = scmp.eq.s32.totalorder %s24, 0
      %p192 = por %p190, %p191
      %p193 = scmp.ne.s32.totalorder %s181, %s182
      %p194 = scmp.eq.s32.totalorder %s25, 1
      %p195 = por %p193, %p194
      %p197 = scmp.ne.s32.totalorder %s182, %s196
      %p198 = scmp.eq.s32.totalorder %s25, 0
      %p199 = por %p197, %p198
      %s201 = sadd.s32 %s200, 1
      %p204 = scmp.eq.s32.totalorder %s19, 1
      %p205 = scmp.ne.s32.totalorder %s200, %s202
      %p206 = scmp.eq.s32.totalorder %s19, 0
      %p207 = por %p205, %p206
      %p208 = scmp.ne.s32.totalorder %s200, %s202
      %p209 = scmp.eq.s32.totalorder %s24, 1
      %p210 = por %p208, %p209
      %p211 = scmp.ne.s32.totalorder %s202, %s203
      %p212 = scmp.eq.s32.totalorder %s24, 0
      %p213 = por %p211, %p212
      %p214 = scmp.ne.s32.totalorder %s202, %s203
      %p215 = scmp.eq.s32.totalorder %s25, 1
      %p216 = por %p214, %p215
      %p218 = scmp.ne.s32.totalorder %s203, %s217
      %p219 = scmp.eq.s32.totalorder %s25, 0
      %p220 = por %p218, %p219
      %s221 = ssub.s32 %s19, %s26
      %p222 = scmp.eq.s32.totalorder %s221, 0
      %s224 = sadd.s32 %s223, 1
      %s225 = scalar_select %p222, %s223, %s224
      %p228 = pneg %p222
      %p229 = scmp.eq.s32.totalorder %s19, 1
      %p230 = por %p228, %p229
      %p231 = scmp.ne.s32.totalorder %s223, %s226
      %p232 = scmp.eq.s32.totalorder %s19, 0
      %p233 = por %p231, %p232
      %p234 = scmp.ne.s32.totalorder %s223, %s226
      %p235 = scmp.eq.s32.totalorder %s24, 1
      %p236 = por %p234, %p235
      %p237 = scmp.ne.s32.totalorder %s226, %s227
      %p238 = scmp.eq.s32.totalorder %s24, 0
      %p239 = por %p237, %p238
      %p240 = scmp.ne.s32.totalorder %s226, %s227
      %p241 = scmp.eq.s32.totalorder %s25, 1
      %p242 = por %p240, %p241
      %p244 = scmp.ne.s32.totalorder %s227, %s243
      %p245 = scmp.eq.s32.totalorder %s25, 0
      %p246 = por %p244, %p245
      %s247 = ssub.s32 %s19, %s26
      %p248 = scmp.eq.s32.totalorder %s247, 0
      %s250 = sadd.s32 %s249, 1
      %s251 = scalar_select %p248, %s249, %s250
      %p254 = pneg %p248
      %p255 = scmp.eq.s32.totalorder %s19, 1
      %p256 = por %p254, %p255
      %p257 = scmp.ne.s32.totalorder %s249, %s252
      %p258 = scmp.eq.s32.totalorder %s19, 0
      %p259 = por %p257, %p258
      %p260 = scmp.ne.s32.totalorder %s249, %s252
      %p261 = scmp.eq.s32.totalorder %s24, 1
      %p262 = por %p260, %p261
      %p263 = scmp.ne.s32.totalorder %s252, %s253
      %p264 = scmp.eq.s32.totalorder %s24, 0
      %p265 = por %p263, %p264
      %p266 = scmp.ne.s32.totalorder %s252, %s253
      %p267 = scmp.eq.s32.totalorder %s25, 1
      %p268 = por %p266, %p267
      %p270 = scmp.ne.s32.totalorder %s253, %s269
      %p271 = scmp.eq.s32.totalorder %s25, 0
      %p272 = por %p270, %p271
      %p273 = scmp.le.s32.totalorder 1, %s19
      %p274 = scmp.lt.s32.totalorder %s19, 3
      %p275 = pnand %p273, %p274
      %p276 = pneg %p275
      // Predicated region
      $region9: #{tpu_custom_call.1} parent=5 // pred_check
        _
      $region10: #{tpu_custom_call.1} parent=5 // pred_check_branch
        %278 = sbr.rel (%p275) target = $region12
      $region11: #{tpu_custom_call.1} parent=5 // pred_region
        %s279 = ssub.s32 %s19, 1
        // Predicated region
        $region13: #{tpu_custom_call.1} parent=11 // pred_check
          %p280 = pneg %p66
        $region14: #{tpu_custom_call.1} parent=11 // pred_check_branch
          %282 = sbr.rel (%p280) target = $region16
        $region15: #{tpu_custom_call.1} parent=11 // pred_region
          _
        $region16: #{tpu_custom_call.1} parent=11 // pred_fallthru
          _
        // Predicated region
        $region17: #{tpu_custom_call.1} parent=11 // pred_check
          %p283 = pneg %p87
        $region18: #{tpu_custom_call.1} parent=11 // pred_check_branch
          %285 = sbr.rel (%p283) target = $region20
        $region19: #{tpu_custom_call.1} parent=11 // pred_region
          _
        $region20: #{tpu_custom_call.1} parent=11 // pred_fallthru
          _
        // Predicated region
        $region21: #{tpu_custom_call.1} parent=11 // pred_check
          %p286 = pneg %p108
        $region22: #{tpu_custom_call.1} parent=11 // pred_check_branch
          %288 = sbr.rel (%p286) target = $region24
        $region23: #{tpu_custom_call.1} parent=11 // pred_region
          _
        $region24: #{tpu_custom_call.1} parent=11 // pred_fallthru
          _
        // Predicated region
        $region25: #{tpu_custom_call.1} parent=11 // pred_check
          %p289 = pneg %p129
        $region26: #{tpu_custom_call.1} parent=11 // pred_check_branch
          %291 = sbr.rel (%p289) target = $region28
        $region27: #{tpu_custom_call.1} parent=11 // pred_region
          _
        $region28: #{tpu_custom_call.1} parent=11 // pred_fallthru
          _
        // Predicated region
        $region29: #{tpu_custom_call.1} parent=11 // pred_check
          %p292 = pneg %p150
        $region30: #{tpu_custom_call.1} parent=11 // pred_check_branch
          %294 = sbr.rel (%p292) target = $region32
        $region31: #{tpu_custom_call.1} parent=11 // pred_region
          _
        $region32: #{tpu_custom_call.1} parent=11 // pred_fallthru
          _
        // Predicated region
        $region33: #{tpu_custom_call.1} parent=11 // pred_check
          %p295 = pneg %p171
        $region34: #{tpu_custom_call.1} parent=11 // pred_check_branch
          %297 = sbr.rel (%p295) target = $region36
        $region35: #{tpu_custom_call.1} parent=11 // pred_region
          _
        $region36: #{tpu_custom_call.1} parent=11 // pred_fallthru
          _
        // Predicated region
        $region37: #{tpu_custom_call.1} parent=11 // pred_check
          %p298 = pneg %p192
        $region38: #{tpu_custom_call.1} parent=11 // pred_check_branch
          %300 = sbr.rel (%p298) target = $region40
        $region39: #{tpu_custom_call.1} parent=11 // pred_region
          _
        $region40: #{tpu_custom_call.1} parent=11 // pred_fallthru
          _
        // Predicated region
        $region41: #{tpu_custom_call.1} parent=11 // pred_check
          %p301 = pneg %p213
        $region42: #{tpu_custom_call.1} parent=11 // pred_check_branch
          %303 = sbr.rel (%p301) target = $region44
        $region43: #{tpu_custom_call.1} parent=11 // pred_region
          _
        $region44: #{tpu_custom_call.1} parent=11 // pred_fallthru
          _
      $region12: #{tpu_custom_call.1} parent=5 // pred_fallthru
        _
      %p304 = scmp.lt.s32.totalorder %s19, 2
      // Predicated region
      $region45: #{tpu_custom_call.1} parent=5 // pred_check
        %p305 = pneg %p304
      $region46: #{tpu_custom_call.1} parent=5 // pred_check_branch
        %307 = sbr.rel (%p305) target = $region48
      $region47: #{tpu_custom_call.1} parent=5 // pred_region
        // Predicated region
        $region49: #{tpu_custom_call.1} parent=47 // pred_check
          %p308 = pneg %p39
        $region50: #{tpu_custom_call.1} parent=47 // pred_check_branch
          %310 = sbr.rel (%p308) target = $region52
        $region51: #{tpu_custom_call.1} parent=47 // pred_region
          %p311 = scmp.lt.s32.totalorder %s19, 1
          %s312 = scalar_select %p311, %s19, 1
          %s313 = smul.addr %s312, 8
          %s314 = scalar_lea.vmem %s0, %s313
        $region52: #{tpu_custom_call.1} parent=47 // pred_fallthru
          _
        // Predicated region
        $region53: #{tpu_custom_call.1} parent=47 // pred_check
          %p315 = pneg %p233
        $region54: #{tpu_custom_call.1} parent=47 // pred_check_branch
          %317 = sbr.rel (%p315) target = $region56
        $region55: #{tpu_custom_call.1} parent=47 // pred_region
          %p318 = scmp.lt.s32.totalorder %s19, 1
          %s319 = scalar_select %p318, %s19, 1
          %s320 = smul.addr %s319, 8
          %s321 = scalar_lea.vmem %s9, %s320
        $region56: #{tpu_custom_call.1} parent=47 // pred_fallthru
          _
      $region48: #{tpu_custom_call.1} parent=5 // pred_fallthru
        _
      %p322 = scmp.le.s32.totalorder 1, %s19
      %p323 = scmp.lt.s32.totalorder %s19, 3
      %p324 = pnand %p322, %p323
      %p325 = pneg %p324
      // Predicated region
      $region57: #{tpu_custom_call.1} parent=5 // pred_check
        _
      $region58: #{tpu_custom_call.1} parent=5 // pred_check_branch
        %327 = sbr.rel (%p324) target = $region60
      $region59: #{tpu_custom_call.1} parent=5 // pred_region
        %s328 = ssub.s32 %s19, 1
        %p329 = scmp.lt.s32.totalorder %s24, 1
        %s330 = scalar_select %p329, %s24, 1
        %s331 = smul.addr %s330, 8
        %s332 = scalar_lea.vmem %s0, %s331
        %p333 = pneg %p45
        %p334 = pneg %p42
        %p335 = pneg %p66
        %p336 = pneg %p63
        %p337 = pneg %p87
        %p338 = pneg %p84
        %p339 = pneg %p108
        %p340 = pneg %p105
        %p341 = pneg %p129
        %p342 = pneg %p126
        %p343 = pneg %p150
        %p344 = pneg %p147
        %p345 = pneg %p171
        %p346 = pneg %p168
        %p347 = pneg %p192
        %p348 = pneg %p189
        %p349 = pneg %p213
        %p350 = pneg %p210
        %p351 = scmp.lt.s32.totalorder %s24, 1
        %s352 = scalar_select %p351, %s24, 1
        %s353 = smul.addr %s352, 8
        %s354 = scalar_lea.vmem %s9, %s353
        %p355 = pneg %p239
        %p356 = pneg %p236
        %p357 = pneg %p265
        %p358 = pneg %p262
        %s359 = sand.u32 %s252, 1
        %s360 = scalar_lea.sflag [#allocation3], %s359
        %s361 = sand.u32 %s252, 1
        %s362 = smul.addr %s361, 8
        %s363 = scalar_lea.vmem [#allocation2], %s362
        %p364 = scmp.lt.s32.totalorder %s24, 1
        %s365 = scalar_select %p364, %s24, 1
        %s366 = smul.addr %s365, 8
        %s367 = scalar_lea.vmem %s0, %s366
        %p368 = scmp.lt.s32.totalorder %s24, 1
        %s369 = scalar_select %p368, %s24, 1
        %s370 = smul.addr %s369, 8
        %s371 = scalar_lea.vmem %s9, %s370
        %v372 = vld [vmem:[%s367] sm:$0xff]
        %v373 = vld [vmem:[%s1] sm:$0xff]
        %v374 = vld [vmem:[%s1 + $0x8] sm:$0xff]
        %v375 = vld [vmem:[%s1 + $0x10] sm:$0xff]
        %v376 = vld [vmem:[%s1 + $0x18] sm:$0xff]
        %v377 = vld [vmem:[%s2] sm:$0x1]
        %v379 = vlaneseq
        %v380 = vshrl.u32 %v379, 7
        %v381 = vsub.s32 0, %v380
        %v382 = vrot.slane %v377, %v381
        %vm384 = vcmask 261120
        %v386 = vsel %vm384, %v372, 0
        %388 = vmatprep.subr.mxu0 0.0
        %389 = vmatpush1.msra.mxu0 0.0
        %390 = vmatprep.subr.mxu0 0.0
        %391 = vmatpush1.msra.mxu0 0.0
        %392 = vmatprep.subr.mxu0 0.0
        %393 = vmatpush1.msra.mxu0 0.0
        %394 = vmatprep.subr.mxu0 0.0
        %395 = vmatpush1.msra.mxu0 0.0
        %396 = vmatprep.subr.mxu0 0.0
        %397 = vmatpush1.msra.mxu0 0.0
        %398 = vmatprep.subr.mxu0 0.0
        %399 = vmatpush1.msra.mxu0 0.0
        %400 = vmatprep.subr.mxu0 0.0
        %401 = vmatpush1.msra.mxu0 0.0
        %402 = vmatprep.subr.mxu0 0.0
        %403 = vmatpush1.msra.mxu0 0.0
        %404 = vmatprep.subr.mxu0 0.0
        %405 = vmatpush1.msra.mxu0 0.0
        %406 = vmatprep.subr.mxu0 0.0
        %407 = vmatpush1.msra.mxu0 0.0
        %408 = vmatprep.subr.mxu0 0.0
        %409 = vmatpush1.msra.mxu0 0.0
        %410 = vmatprep.subr.mxu0 0.0
        %411 = vmatpush1.msra.mxu0 0.0
        %412 = vmatprep.subr.mxu0 0.0
        %413 = vmatpush1.msra.mxu0 %v376
        %414 = vmatprep.subr.mxu0 0.0
        %415 = vmatpush1.msra.mxu0 %v375
        %416 = vmatprep.subr.mxu0 0.0
        %417 = vmatpush1.msra.mxu0 %v374
        %418 = vmatprep.subr.mxu0 0.0
        %419 = vmatpush1.msra.mxu0 %v373
        %420 = vmatprep.subr.mxu0 0.0
        %421 = vmatpush2.msra.mxu0 0.0
        %422 = vmatprep.subr.mxu0 0.0
        %423 = vmatpush2.msra.mxu0 0.0
        %424 = vmatprep.subr.mxu0 0.0
        %425 = vmatpush2.msra.mxu0 0.0
        %426 = vmatprep.subr.mxu0 0.0
        %427 = vmatpush2.msra.mxu0 0.0
        %428 = vmatprep.subr.mxu0 0.0
        %429 = vmatpush2.msra.mxu0 0.0
        %430 = vmatprep.subr.mxu0 0.0
        %431 = vmatpush2.msra.mxu0 0.0
        %432 = vmatprep.subr.mxu0 0.0
        %433 = vmatpush2.msra.mxu0 0.0
        %434 = vmatprep.subr.mxu0 0.0
        %435 = vmatpush2.msra.mxu0 0.0
        %436 = vmatprep.subr.mxu0 0.0
        %437 = vmatpush2.msra.mxu0 0.0
        %438 = vmatprep.subr.mxu0 0.0
        %439 = vmatpush2.msra.mxu0 0.0
        %440 = vmatprep.subr.mxu0 0.0
        %441 = vmatpush2.msra.mxu0 0.0
        %442 = vmatprep.subr.mxu0 0.0
        %443 = vmatpush2.msra.mxu0 0.0
        %444 = vmatprep.subr.mxu0 0.0
        %445 = vmatpush2.msra.mxu0 0.0
        %446 = vmatprep.subr.mxu0 0.0
        %447 = vmatpush2.msra.mxu0 0.0
        %448 = vmatprep.subr.mxu0 0.0
        %449 = vmatpush2.msra.mxu0 0.0
        %450 = vmatprep.subr.mxu0 0.0
        %451 = vmatpush2.msra.mxu0 0.0
        %452 = vmatprep.mubr.f32.mxu0 0.0
        %453 = vmatmul.mubr.f32.gmra.mxu0 %v386
        %v454 = vpop.f32.mrf.mxu0
        %v455 = vadd.f32 %v382, %v454
        %v456 = vpop.f32.mrf.mxu0
        %457 = vdwg.mxu0
        %v458 = vmax.f32 %v455, 0.0
        %v459 = vld [vmem:[%s3] sm:$0xff]
        %v460 = vld [vmem:[%s3 + $0x8] sm:$0xff]
        %v461 = vld [vmem:[%s3 + $0x10] sm:$0xff]
        %v462 = vld [vmem:[%s3 + $0x18] sm:$0xff]
        %v463 = vld [vmem:[%s3 + $0x20] sm:$0xff]
        %v464 = vld [vmem:[%s3 + $0x28] sm:$0xff]
        %v465 = vld [vmem:[%s3 + $0x30] sm:$0xff]
        %v466 = vld [vmem:[%s3 + $0x38] sm:$0xff]
        %v467 = vld [vmem:[%s4] sm:$0x1]
        %v469 = vlaneseq
        %v470 = vshrl.u32 %v469, 7
        %v471 = vsub.s32 0, %v470
        %v472 = vrot.slane %v467, %v471
        %vm474 = vcmask 523264
        %v476 = vsel %vm474, %v458, 0
        %478 = vmatprep.subr.mxu0 0.0
        %479 = vmatpush1.msra.mxu0 0.0
        %480 = vmatprep.subr.mxu0 0.0
        %481 = vmatpush1.msra.mxu0 0.0
        %482 = vmatprep.subr.mxu0 0.0
        %483 = vmatpush1.msra.mxu0 0.0
        %484 = vmatprep.subr.mxu0 0.0
        %485 = vmatpush1.msra.mxu0 0.0
        %486 = vmatprep.subr.mxu0 0.0
        %487 = vmatpush1.msra.mxu0 0.0
        %488 = vmatprep.subr.mxu0 0.0
        %489 = vmatpush1.msra.mxu0 0.0
        %490 = vmatprep.subr.mxu0 0.0
        %491 = vmatpush1.msra.mxu0 0.0
        %492 = vmatprep.subr.mxu0 0.0
        %493 = vmatpush1.msra.mxu0 0.0
        %494 = vmatprep.subr.mxu0 0.0
        %495 = vmatpush1.msra.mxu0 %v466
        %496 = vmatprep.subr.mxu0 0.0
        %497 = vmatpush1.msra.mxu0 %v465
        %498 = vmatprep.subr.mxu0 0.0
        %499 = vmatpush1.msra.mxu0 %v464
        %500 = vmatprep.subr.mxu0 0.0
        %501 = vmatpush1.msra.mxu0 %v463
        %502 = vmatprep.subr.mxu0 0.0
        %503 = vmatpush1.msra.mxu0 %v462
        %504 = vmatprep.subr.mxu0 0.0
        %505 = vmatpush1.msra.mxu0 %v461
        %506 = vmatprep.subr.mxu0 0.0
        %507 = vmatpush1.msra.mxu0 %v460
        %508 = vmatprep.subr.mxu0 0.0
        %509 = vmatpush1.msra.mxu0 %v459
        %510 = vmatprep.subr.mxu0 0.0
        %511 = vmatpush2.msra.mxu0 0.0
        %512 = vmatprep.subr.mxu0 0.0
        %513 = vmatpush2.msra.mxu0 0.0
        %514 = vmatprep.subr.mxu0 0.0
        %515 = vmatpush2.msra.mxu0 0.0
        %516 = vmatprep.subr.mxu0 0.0
        %517 = vmatpush2.msra.mxu0 0.0
        %518 = vmatprep.subr.mxu0 0.0
        %519 = vmatpush2.msra.mxu0 0.0
        %520 = vmatprep.subr.mxu0 0.0
        %521 = vmatpush2.msra.mxu0 0.0
        %522 = vmatprep.subr.mxu0 0.0
        %523 = vmatpush2.msra.mxu0 0.0
        %524 = vmatprep.subr.mxu0 0.0
        %525 = vmatpush2.msra.mxu0 0.0
        %526 = vmatprep.subr.mxu0 0.0
        %527 = vmatpush2.msra.mxu0 0.0
        %528 = vmatprep.subr.mxu0 0.0
        %529 = vmatpush2.msra.mxu0 0.0
        %530 = vmatprep.subr.mxu0 0.0
        %531 = vmatpush2.msra.mxu0 0.0
        %532 = vmatprep.subr.mxu0 0.0
        %533 = vmatpush2.msra.mxu0 0.0
        %534 = vmatprep.subr.mxu0 0.0
        %535 = vmatpush2.msra.mxu0 0.0
        %536 = vmatprep.subr.mxu0 0.0
        %537 = vmatpush2.msra.mxu0 0.0
        %538 = vmatprep.subr.mxu0 0.0
        %539 = vmatpush2.msra.mxu0 0.0
        %540 = vmatprep.subr.mxu0 0.0
        %541 = vmatpush2.msra.mxu0 0.0
        %542 = vmatprep.mubr.f32.mxu0 0.0
        %543 = vmatmul.mubr.f32.gmra.mxu0 %v476
        %v544 = vpop.f32.mrf.mxu0
        %v545 = vadd.f32 %v472, %v544
        %v546 = vpop.f32.mrf.mxu0
        %547 = vdwg.mxu0
        %v548 = vmax.f32 %v545, 0.0
        %v549 = vld [vmem:[%s5] sm:$0xff]
        %v550 = vld [vmem:[%s5 + $0x8] sm:$0xff]
        %v551 = vld [vmem:[%s5 + $0x10] sm:$0xff]
        %v552 = vld [vmem:[%s5 + $0x18] sm:$0xff]
        %v553 = vld [vmem:[%s5 + $0x20] sm:$0xff]
        %v554 = vld [vmem:[%s5 + $0x28] sm:$0xff]
        %v555 = vld [vmem:[%s6] sm:$0x1]
        %v557 = vlaneseq
        %v558 = vshrl.u32 %v557, 7
        %v559 = vsub.s32 0, %v558
        %v560 = vrot.slane %v555, %v559
        %vm562 = vcmask 392192
        %v564 = vsel %vm562, %v548, 0
        %566 = vmatprep.subr.mxu0 0.0
        %567 = vmatpush1.msra.mxu0 0.0
        %568 = vmatprep.subr.mxu0 0.0
        %569 = vmatpush1.msra.mxu0 0.0
        %570 = vmatprep.subr.mxu0 0.0
        %571 = vmatpush1.msra.mxu0 0.0
        %572 = vmatprep.subr.mxu0 0.0
        %573 = vmatpush1.msra.mxu0 0.0
        %574 = vmatprep.subr.mxu0 0.0
        %575 = vmatpush1.msra.mxu0 0.0
        %576 = vmatprep.subr.mxu0 0.0
        %577 = vmatpush1.msra.mxu0 0.0
        %578 = vmatprep.subr.mxu0 0.0
        %579 = vmatpush1.msra.mxu0 0.0
        %580 = vmatprep.subr.mxu0 0.0
        %581 = vmatpush1.msra.mxu0 0.0
        %582 = vmatprep.subr.mxu0 0.0
        %583 = vmatpush1.msra.mxu0 0.0
        %584 = vmatprep.subr.mxu0 0.0
        %585 = vmatpush1.msra.mxu0 0.0
        %586 = vmatprep.subr.mxu0 0.0
        %587 = vmatpush1.msra.mxu0 %v554
        %588 = vmatprep.subr.mxu0 0.0
        %589 = vmatpush1.msra.mxu0 %v553
        %590 = vmatprep.subr.mxu0 0.0
        %591 = vmatpush1.msra.mxu0 %v552
        %592 = vmatprep.subr.mxu0 0.0
        %593 = vmatpush1.msra.mxu0 %v551
        %594 = vmatprep.subr.mxu0 0.0
        %595 = vmatpush1.msra.mxu0 %v550
        %596 = vmatprep.subr.mxu0 0.0
        %597 = vmatpush1.msra.mxu0 %v549
        %598 = vmatprep.subr.mxu0 0.0
        %599 = vmatpush2.msra.mxu0 0.0
        %600 = vmatprep.subr.mxu0 0.0
        %601 = vmatpush2.msra.mxu0 0.0
        %602 = vmatprep.subr.mxu0 0.0
        %603 = vmatpush2.msra.mxu0 0.0
        %604 = vmatprep.subr.mxu0 0.0
        %605 = vmatpush2.msra.mxu0 0.0
        %606 = vmatprep.subr.mxu0 0.0
        %607 = vmatpush2.msra.mxu0 0.0
        %608 = vmatprep.subr.mxu0 0.0
        %609 = vmatpush2.msra.mxu0 0.0
        %610 = vmatprep.subr.mxu0 0.0
        %611 = vmatpush2.msra.mxu0 0.0
        %612 = vmatprep.subr.mxu0 0.0
        %613 = vmatpush2.msra.mxu0 0.0
        %614 = vmatprep.subr.mxu0 0.0
        %615 = vmatpush2.msra.mxu0 0.0
        %616 = vmatprep.subr.mxu0 0.0
        %617 = vmatpush2.msra.mxu0 0.0
        %618 = vmatprep.subr.mxu0 0.0
        %619 = vmatpush2.msra.mxu0 0.0
        %620 = vmatprep.subr.mxu0 0.0
        %621 = vmatpush2.msra.mxu0 0.0
        %622 = vmatprep.subr.mxu0 0.0
        %623 = vmatpush2.msra.mxu0 0.0
        %624 = vmatprep.subr.mxu0 0.0
        %625 = vmatpush2.msra.mxu0 0.0
        %626 = vmatprep.subr.mxu0 0.0
        %627 = vmatpush2.msra.mxu0 0.0
        %628 = vmatprep.subr.mxu0 0.0
        %629 = vmatpush2.msra.mxu0 0.0
        %630 = vmatprep.mubr.f32.mxu0 0.0
        %631 = vmatmul.mubr.f32.gmra.mxu0 %v564
        %v632 = vpop.f32.mrf.mxu0
        %v633 = vadd.f32 %v560, %v632
        %v634 = vpop.f32.mrf.mxu0
        %635 = vdwg.mxu0
        %v636 = vmax.f32 %v633, 0.0
        %v637 = vld [vmem:[%s7] sm:$0xff]
        %v638 = vld [vmem:[%s7 + $0x8] sm:$0xff]
        %v639 = vld [vmem:[%s7 + $0x10] sm:$0xff]
        %v640 = vld [vmem:[%s7 + $0x18] sm:$0xff]
        %v641 = vld [vmem:[%s8] sm:$0x1]
        %v643 = vlaneseq
        %v644 = vshrl.u32 %v643, 7
        %v645 = vsub.s32 0, %v644
        %v646 = vrot.slane %v641, %v645
        %v649 = vsel %vm384, %v636, 0
        %651 = vmatprep.subr.mxu0 0.0
        %652 = vmatpush1.msra.mxu0 0.0
        %653 = vmatprep.subr.mxu0 0.0
        %654 = vmatpush1.msra.mxu0 0.0
        %655 = vmatprep.subr.mxu0 0.0
        %656 = vmatpush1.msra.mxu0 0.0
        %657 = vmatprep.subr.mxu0 0.0
        %658 = vmatpush1.msra.mxu0 0.0
        %659 = vmatprep.subr.mxu0 0.0
        %660 = vmatpush1.msra.mxu0 0.0
        %661 = vmatprep.subr.mxu0 0.0
        %662 = vmatpush1.msra.mxu0 0.0
        %663 = vmatprep.subr.mxu0 0.0
        %664 = vmatpush1.msra.mxu0 0.0
        %665 = vmatprep.subr.mxu0 0.0
        %666 = vmatpush1.msra.mxu0 0.0
        %667 = vmatprep.subr.mxu0 0.0
        %668 = vmatpush1.msra.mxu0 0.0
        %669 = vmatprep.subr.mxu0 0.0
        %670 = vmatpush1.msra.mxu0 0.0
        %671 = vmatprep.subr.mxu0 0.0
        %672 = vmatpush1.msra.mxu0 0.0
        %673 = vmatprep.subr.mxu0 0.0
        %674 = vmatpush1.msra.mxu0 0.0
        %675 = vmatprep.subr.mxu0 0.0
        %676 = vmatpush1.msra.mxu0 %v640
        %677 = vmatprep.subr.mxu0 0.0
        %678 = vmatpush1.msra.mxu0 %v639
        %679 = vmatprep.subr.mxu0 0.0
        %680 = vmatpush1.msra.mxu0 %v638
        %681 = vmatprep.subr.mxu0 0.0
        %682 = vmatpush1.msra.mxu0 %v637
        %683 = vmatprep.subr.mxu0 0.0
        %684 = vmatpush2.msra.mxu0 0.0
        %685 = vmatprep.subr.mxu0 0.0
        %686 = vmatpush2.msra.mxu0 0.0
        %687 = vmatprep.subr.mxu0 0.0
        %688 = vmatpush2.msra.mxu0 0.0
        %689 = vmatprep.subr.mxu0 0.0
        %690 = vmatpush2.msra.mxu0 0.0
        %691 = vmatprep.subr.mxu0 0.0
        %692 = vmatpush2.msra.mxu0 0.0
        %693 = vmatprep.subr.mxu0 0.0
        %694 = vmatpush2.msra.mxu0 0.0
        %695 = vmatprep.subr.mxu0 0.0
        %696 = vmatpush2.msra.mxu0 0.0
        %697 = vmatprep.subr.mxu0 0.0
        %698 = vmatpush2.msra.mxu0 0.0
        %699 = vmatprep.subr.mxu0 0.0
        %700 = vmatpush2.msra.mxu0 0.0
        %701 = vmatprep.subr.mxu0 0.0
        %702 = vmatpush2.msra.mxu0 0.0
        %703 = vmatprep.subr.mxu0 0.0
        %704 = vmatpush2.msra.mxu0 0.0
        %705 = vmatprep.subr.mxu0 0.0
        %706 = vmatpush2.msra.mxu0 0.0
        %707 = vmatprep.subr.mxu0 0.0
        %708 = vmatpush2.msra.mxu0 0.0
        %709 = vmatprep.subr.mxu0 0.0
        %710 = vmatpush2.msra.mxu0 0.0
        %711 = vmatprep.subr.mxu0 0.0
        %712 = vmatpush2.msra.mxu0 0.0
        %713 = vmatprep.subr.mxu0 0.0
        %714 = vmatpush2.msra.mxu0 0.0
        %715 = vmatprep.mubr.f32.mxu0 0.0
        %716 = vmatmul.mubr.f32.gmra.mxu0 %v649
        %v717 = vpop.f32.mrf.mxu0
        %v718 = vadd.f32 %v646, %v717
        %v719 = vpop.f32.mrf.mxu0
        %720 = vdwg.mxu0
        %v721 = vmul.f32 %v718, 0.5
        %v722 = vmul.f32 %v721, 1.442695
        %v723 = vpow.pop %v722
        %v724 = vld [vmem:[%s371] sm:$0xff]
        %726 = vrot.lane.b32.xlu0 %v723, 112
        %v727 = vpop.permute.xlu0 %726
        %v729 = vmul.f32 %v724, %v727
        %v730 = vadd.f32 %v729, %v718
        %731 = vst.msk [vmem:[%s363] sm:$0xff] %vm384, %v718
        %733 = vrot.lane.b32.xlu0 %v730, 32
        %v734 = vpop.permute.xlu0 %733
        %vm736 = vcmask 392448
        %737 = vst.msk [vmem:[%s363] sm:$0xff] %vm736, %v734
        %s738 = sand.u32 %s252, 1
        %s739 = scalar_lea.sflag [#allocation3], %s738
        %s740 = sand.u32 %s252, 1
        %s741 = smul.addr %s740, 8
        %s742 = scalar_lea.vmem [#allocation2], %s741
        // Predicated region
        $region61: #{tpu_custom_call.1} parent=59 // pred_check
          %p743 = pneg %p262
        $region62: #{tpu_custom_call.1} parent=59 // pred_check_branch
          %745 = sbr.rel (%p743) target = $region64
        $region63: #{tpu_custom_call.1} parent=59 // pred_region
          %s747 = ssub.s32 128, 128
          %748 = vsyncadd %s739, %s747
          %s749 = smul.addr %s24, 128
          %s750 = scalar_lea.hbm %s10, %s749
          %s752 = sshll.u32 %s742, 4
          %s753 = int_to_ptr.vmem [resolvable:$true] %s752
          %755 = dma.vmem_to_hbm [thread:$0]  %s753, 128, %s750, %s739
        $region64: #{tpu_custom_call.1} parent=59 // pred_fallthru
          _
      $region60: #{tpu_custom_call.1} parent=5 // pred_fallthru
        _
      %p756 = scmp.le.s32.totalorder 2, %s19
      // Predicated region
      $region65: #{tpu_custom_call.1} parent=5 // pred_check
        %p757 = pneg %p756
      $region66: #{tpu_custom_call.1} parent=5 // pred_check_branch
        %759 = sbr.rel (%p757) target = $region68
      $region67: #{tpu_custom_call.1} parent=5 // pred_region
        %s760 = ssub.s32 %s19, 2
        // Predicated region
        $region69: #{tpu_custom_call.1} parent=67 // pred_check
          %p761 = pneg %p268
        $region70: #{tpu_custom_call.1} parent=67 // pred_check_branch
          %763 = sbr.rel (%p761) target = $region72
        $region71: #{tpu_custom_call.1} parent=67 // pred_region
          %s764 = sand.u32 %s253, 1
          %s765 = scalar_lea.sflag [#allocation3], %s764
          %s766 = sand.u32 %s253, 1
          %s767 = smul.addr %s766, 8
          %s768 = scalar_lea.vmem [#allocation2], %s767
          %769 = dma.done %s765, 128
        $region72: #{tpu_custom_call.1} parent=67 // pred_fallthru
          _
      $region68: #{tpu_custom_call.1} parent=5 // pred_fallthru
        _
    $region6: #{tpu_custom_call.1} parent=1 // loop_footer
      %s23 = sadd.s32 1, %s19
    $region7: #{tpu_custom_call.1} parent=1 // loop_footer_branch
      %18 = sbr.rel target = $region3
    $region8: #{tpu_custom_call.1} parent=1 // loop_exit
      _
    %770 = vsyncpa [#allocation3], 1
    %s771 = scalar_lea.sflag [#allocation3], 1
    %772 = vsyncpa %s771, 1

</llo_original>
